<compile_context>
chip_gen: v6e
topology: v6e:2x2x1
jax: 0.10.0
libtpu: 0.0.40
codegen_flags: <defaults>
</compile_context>

<pallas_src>
import jax
import jax.numpy as jnp
from jax.experimental import pallas as pl
from jax.experimental.pallas import tpu as pltpu

BN_EPS = 1e-5


def _make_residual_kernel(o, tile_o, num_tiles, use_bf16_matmul):
    def kernel(x_ref, w_ref, gamma_ref, beta_ref, out_ref):
        j = pl.program_id(0)

        x = x_ref[...]                                    # (N, i)  f32, resident
        w = w_ref[...]                                    # (i, tile_o)

        if use_bf16_matmul:
            h = jnp.dot(x.astype(jnp.bfloat16), w.astype(jnp.bfloat16),
                        preferred_element_type=jnp.float32)
        else:
            h = jnp.dot(x, w, preferred_element_type=jnp.float32)   # (N, tile_o)

        # Training-mode BN over the batch dim, single reduction pass:
        #   mean = E[h],  var = E[h^2] - mean^2   (biased, as PyTorch normalizes)
        n = x.shape[0]
        inv_n = 1.0 / n
        mean = jnp.sum(h, axis=0, keepdims=True) * inv_n            # (1, tile_o)
        ex2 = jnp.sum(h * h, axis=0, keepdims=True) * inv_n
        var = jnp.maximum(ex2 - mean * mean, 0.0)

        scale = gamma_ref[...] * jax.lax.rsqrt(var + BN_EPS)        # (1, tile_o)
        shift = beta_ref[...] - mean * scale

        y = jnp.maximum(h * scale + shift, 0.0)                     # fused BN+ReLU

        # Slice-store straight from the source vregs (no concat temporary).
        if num_tiles == 1:
            out_ref[:, :o] = y.astype(out_ref.dtype)
        else:
            # tile_o is a multiple of 128 whenever num_tiles > 1, so these
            # dynamic lane offsets are always 128-aligned.
            col0 = pl.multiple_of(j * tile_o, tile_o)
            out_ref[:, pl.ds(col0, tile_o)] = y.astype(out_ref.dtype)

        @pl.when(j == 0)
        def _():
            # Residual passthrough: columns [o, o + i).
            out_ref[:, o:] = x.astype(out_ref.dtype)

    return kernel


def _pick_feature_tile(o):
    """Largest lane-aligned tile that divides o; otherwise one full-width block
    (allowed because a block equal to the full array dim bypasses the 128 rule)."""
    if o > 512:
        for t in (512, 256, 128):
            if o % t == 0:
                return t
    return o


def residual_forward(x, w, b, gamma, beta, *, use_bf16_matmul=False):
    """CTGAN Residual forward.

    x: (N, i) f32;  w: (i, o) f32 (pre-transposed Linear weight = weight.T);
    b, gamma, beta: (o,) f32.  Returns (N, o + i) f32
    == cat([relu(bn(fc(x))), x], dim=1) with training-mode BN.

    `b` is accepted for API parity but unused: the Linear bias cancels exactly
    inside batch-statistics BatchNorm.
    """
    del b  # exact no-op under training-mode BN (see module docstring)
    n, i = x.shape
    i_w, o = w.shape
    assert i_w == i

    tile_o = _pick_feature_tile(o)
    assert o % tile_o == 0
    num_tiles = o // tile_o

    gamma2 = gamma.reshape(1, o).astype(jnp.float32)
    beta2 = beta.reshape(1, o).astype(jnp.float32)

    out_shape = jax.ShapeDtypeStruct((n, o + i), jnp.float32)

    # VMEM budget: x and the output stay resident (constant index maps);
    # the W / gamma / beta column tiles are double-buffered by the pipeline.
    elt = 4
    resident = (n * i + n * (o + i)) * elt
    streamed = 2 * (i * tile_o + 2 * tile_o) * elt
    vmem_limit = int(min(64 * 1024 * 1024,
                         max(2 * (resident + streamed), 16 * 1024 * 1024)))

    cost = pl.CostEstimate(
        flops=2 * n * i * o + 8 * n * o,
        transcendentals=o,                                   # rsqrt per feature
        bytes_accessed=elt * (n * i + i * o + 2 * o + n * (o + i)),
    )

    kernel = _make_residual_kernel(o, tile_o, num_tiles, use_bf16_matmul)

    return pl.pallas_call(
        kernel,
        out_shape=out_shape,
        grid=(num_tiles,),
        in_specs=[
            pl.BlockSpec((n, i), lambda j: (0, 0)),          # x (resident)
            pl.BlockSpec((i, tile_o), lambda j: (0, j)),     # W column tile
            pl.BlockSpec((1, tile_o), lambda j: (0, j)),     # gamma tile
            pl.BlockSpec((1, tile_o), lambda j: (0, j)),     # beta tile
        ],
        out_specs=pl.BlockSpec((n, o + i), lambda j: (0, 0)),  # resident output
        compiler_params=pltpu.CompilerParams(
            # The concatenated output is one resident block revisited across
            # the feature-tile axis -> must be "arbitrary", not "parallel".
            dimension_semantics=("arbitrary",),
            vmem_limit_bytes=vmem_limit,
        ),
        cost_estimate=cost,
    )(x, w, gamma2, beta2)


def residual_reference(x, w, b, gamma, beta):
    """Pure-JAX reference of the PyTorch forward (training-mode BN, with bias)."""
    h = x @ w + b[None, :]
    mean = jnp.mean(h, axis=0, keepdims=True)
    var = jnp.mean((h - mean) ** 2, axis=0, keepdims=True)
    y = (h - mean) / jnp.sqrt(var + BN_EPS) * gamma[None, :] + beta[None, :]
    y = jnp.maximum(y, 0.0)
    return jnp.concatenate([y, x], axis=1)


def _run_case(n, i, o, case_id, *, use_bf16_matmul=False, atol=1e-4, rtol=1e-4):
    key = jax.random.fold_in(jax.random.PRNGKey(0), case_id)
    kx, kw, kb, kg, kbt = jax.random.split(key, 5)

    x = jax.random.normal(kx, (n, i), dtype=jnp.float32)
    bound = 1.0 / (i ** 0.5)
    w = jax.random.uniform(kw, (i, o), minval=-bound, maxval=bound,
                           dtype=jnp.float32)               # = Linear.weight.T
    b = jax.random.uniform(kb, (o,), minval=-bound, maxval=bound,
                           dtype=jnp.float32)
    gamma = 1.0 + 0.1 * jax.random.normal(kg, (o,), dtype=jnp.float32)
    beta = 0.1 * jax.random.normal(kbt, (o,), dtype=jnp.float32)

    out = jax.block_until_ready(
        residual_forward(x, w, b, gamma, beta, use_bf16_matmul=use_bf16_matmul))
    ref = residual_reference(x, w, b, gamma, beta)

    assert out.shape == (n, o + i), out.shape
    assert jnp.allclose(out, ref, atol=atol, rtol=rtol), (
        float(jnp.max(jnp.abs(out - ref))))


if __name__ == "__main__":
    # Small toy shape consistent with Residual(i, o): batch=8, i=64, o=32
    # (single full-width block; also exercises the dropped-bias equivalence).
    _run_case(n=8, i=64, o=32, case_id=0)

    # Shape that exercises the feature-tiled path (o=1024 -> two 512-lane tiles,
    # lane-dense stores, streamed W tiles).
    _run_case(n=8, i=128, o=1024, case_id=1)

    # Optional bf16-matmul MXU path (f32 accumulation / BN), loose tolerance.
    _run_case(n=8, i=128, o=1024, case_id=2, use_bf16_matmul=True,
              atol=1e-1, rtol=1e-1)

    print("KERNEL_OK")
</pallas_src>

<mosaic_0001>
module attributes {stable_mosaic.version = 11 : i64} {
  func.func @kernel(%arg0: i32, %arg1: memref<8x64xf32, #tpu.memory_space<vmem>>, %arg2: memref<64x32xf32, #tpu.memory_space<vmem>>, %arg3: memref<1x32xf32, #tpu.memory_space<vmem>>, %arg4: memref<1x32xf32, #tpu.memory_space<vmem>>, %arg5: memref<8x96xf32, #tpu.memory_space<vmem>>) attributes {dimension_semantics = [#tpu.dimension_semantics<arbitrary>], iteration_bounds = array<i64: 1>, scalar_prefetch = 0 : i64, scratch_operands = 0 : i64, tpu.core_type = #tpu.core_type<tc>, window_params = [{pipeline_mode = #tpu.pipeline_mode<synchronous>, transform_indices = @transform_0, window_bounds = array<i64: 8, 64>}, {transform_indices = @transform_1, window_bounds = array<i64: 64, 32>}, {transform_indices = @transform_2, window_bounds = array<i64: 1, 32>}, {transform_indices = @transform_3, window_bounds = array<i64: 1, 32>}, {pipeline_mode = #tpu.pipeline_mode<synchronous>, transform_indices = @transform_4, window_bounds = array<i64: 8, 96>}]} {
    %c0 = arith.constant 0 : index
    %c0_0 = arith.constant 0 : index
    %0 = vector.load %arg1[%c0, %c0_0] : memref<8x64xf32, #tpu.memory_space<vmem>>, vector<8x64xf32>
    %c0_1 = arith.constant 0 : index
    %c0_2 = arith.constant 0 : index
    %1 = vector.load %arg2[%c0_1, %c0_2] : memref<64x32xf32, #tpu.memory_space<vmem>>, vector<64x32xf32>
    %cst = arith.constant dense<0.000000e+00> : vector<8x32xf32>
    %2 = tpu.matmul %0, %1, %cst {dimension_numbers = #tpu.dot_dimension_numbers<[1], [0], [0], [1], [0, 0, 1, 1], [], []>} : vector<8x64xf32>, vector<64x32xf32>, vector<8x32xf32> -> vector<8x32xf32>
    %cst_3 = arith.constant dense<0.000000e+00> : vector<32xf32>
    %3 = vector.multi_reduction <add>, %2, %cst_3 [0] : vector<8x32xf32> to vector<32xf32>
    %4 = vector.shape_cast %3 : vector<32xf32> to vector<1x32xf32>
    %cst_4 = arith.constant 1.250000e-01 : f32
    %5 = vector.broadcast %cst_4 : f32 to vector<1x32xf32>
    %6 = arith.mulf %4, %5 : vector<1x32xf32>
    %7 = arith.mulf %2, %2 : vector<8x32xf32>
    %cst_5 = arith.constant dense<0.000000e+00> : vector<32xf32>
    %8 = vector.multi_reduction <add>, %7, %cst_5 [0] : vector<8x32xf32> to vector<32xf32>
    %9 = vector.shape_cast %8 : vector<32xf32> to vector<1x32xf32>
    %cst_6 = arith.constant 1.250000e-01 : f32
    %10 = vector.broadcast %cst_6 : f32 to vector<1x32xf32>
    %11 = arith.mulf %9, %10 : vector<1x32xf32>
    %12 = arith.mulf %6, %6 : vector<1x32xf32>
    %13 = arith.subf %11, %12 : vector<1x32xf32>
    %cst_7 = arith.constant 0.000000e+00 : f32
    %14 = vector.broadcast %cst_7 : f32 to vector<1x32xf32>
    %15 = arith.maximumf %13, %14 : vector<1x32xf32>
    %c0_8 = arith.constant 0 : index
    %c0_9 = arith.constant 0 : index
    %16 = vector.load %arg3[%c0_8, %c0_9] : memref<1x32xf32, #tpu.memory_space<vmem>>, vector<1x32xf32>
    %cst_10 = arith.constant 9.99999974E-6 : f32
    %17 = vector.broadcast %cst_10 : f32 to vector<1x32xf32>
    %18 = arith.addf %15, %17 : vector<1x32xf32>
    %19 = math.rsqrt %18 : vector<1x32xf32>
    %20 = arith.mulf %16, %19 : vector<1x32xf32>
    %c0_11 = arith.constant 0 : index
    %c0_12 = arith.constant 0 : index
    %21 = vector.load %arg4[%c0_11, %c0_12] : memref<1x32xf32, #tpu.memory_space<vmem>>, vector<1x32xf32>
    %22 = arith.mulf %6, %20 : vector<1x32xf32>
    %23 = arith.subf %21, %22 : vector<1x32xf32>
    %24 = vector.broadcast %20 : vector<1x32xf32> to vector<8x32xf32>
    %25 = arith.mulf %2, %24 : vector<8x32xf32>
    %26 = vector.broadcast %23 : vector<1x32xf32> to vector<8x32xf32>
    %27 = arith.addf %25, %26 : vector<8x32xf32>
    %cst_13 = arith.constant 0.000000e+00 : f32
    %28 = vector.broadcast %cst_13 : f32 to vector<8x32xf32>
    %29 = arith.maximumf %27, %28 : vector<8x32xf32>
    %c0_14 = arith.constant 0 : index
    %c0_15 = arith.constant 0 : index
    %30 = vector.load %arg5[%c0_14, %c0_15] : memref<8x96xf32, #tpu.memory_space<vmem>>, vector<8x32xf32>
    tpu.vector_store %arg5[%c0_14, %c0_15], %29 {strides = array<i32>} : memref<8x96xf32, #tpu.memory_space<vmem>>, vector<8x32xf32>,
    %c0_i32 = arith.constant 0 : i32
    %31 = arith.cmpi eq, %arg0, %c0_i32 : i32
    %32 = arith.extui %31 : i1 to i32
    %c0_i32_16 = arith.constant 0 : i32
    %33 = arith.cmpi ne, %32, %c0_i32_16 : i32
    scf.if %33 {
      %c0_17 = arith.constant 0 : index
      %c32 = arith.constant 32 : index
      %34 = vector.load %arg5[%c0_17, %c32] : memref<8x96xf32, #tpu.memory_space<vmem>>, vector<8x64xf32>
      tpu.vector_store %arg5[%c0_17, %c32], %0 {strides = array<i32>} : memref<8x96xf32, #tpu.memory_space<vmem>>, vector<8x64xf32>,
    } else {
    }
    return
  }
  func.func @transform_0(%arg0: i32) -> (i32, i32) {
    %c0_i32 = arith.constant 0 : i32
    %c0_i32_0 = arith.constant 0 : i32
    %c0_i32_1 = arith.constant 0 : i32
    return %c0_i32, %c0_i32_0 : i32, i32
  }
  func.func @transform_1(%arg0: i32) -> (i32, i32) {
    %c0_i32 = arith.constant 0 : i32
    %c0_i32_0 = arith.constant 0 : i32
    return %c0_i32, %arg0 : i32, i32
  }
  func.func @transform_2(%arg0: i32) -> (i32, i32) {
    %c0_i32 = arith.constant 0 : i32
    %c0_i32_0 = arith.constant 0 : i32
    return %c0_i32, %arg0 : i32, i32
  }
  func.func @transform_3(%arg0: i32) -> (i32, i32) {
    %c0_i32 = arith.constant 0 : i32
    %c0_i32_0 = arith.constant 0 : i32
    return %c0_i32, %arg0 : i32, i32
  }
  func.func @transform_4(%arg0: i32) -> (i32, i32) {
    %c0_i32 = arith.constant 0 : i32
    %c0_i32_0 = arith.constant 0 : i32
    %c0_i32_1 = arith.constant 0 : i32
    return %c0_i32, %c0_i32_0 : i32, i32
  }
}

</mosaic_0001>

<llo_original>
// kernel: tpu_custom_call.1
$region0: #{tpu_custom_call.1}
  #allocation0 [shape = 'u32[]', space=smem, size = 0x4, offset = 0x4, fixed_abs, tag = 'smem constant byte address 0x4 - core index']
  #allocation1 [shape = 'u32[144,128]{1,0:T(1,128)}', space=vmem, size = 0x12000, scoped, tag = 'internal scratch']
  %s0 = inlined_call_operand.vmem [shape: f32[8,64], index: 0, kind: input, shape index: {}]
  %s1 = inlined_call_operand.vmem [shape: f32[64,32], index: 1, kind: input, shape index: {}]
  %s2 = inlined_call_operand.vmem [shape: f32[1,32], index: 2, kind: input, shape index: {}]
  %s3 = inlined_call_operand.vmem [shape: f32[1,32], index: 3, kind: input, shape index: {}]
  %s4 = inlined_call_operand.hbm [shape: f32[8,96], index: 4, kind: output, shape index: {}]
  %s5 = sld [smem:[#allocation0]]
  $region30: #{tpu_custom_call.1} parent=0
    _
  %s7 = ssub.s32 1, %s5
  %s8 = scalar_select 0, %s7, %s5
  $region1: #{tpu_custom_call.1} parent=0
    #allocation2 [shape = 'u8[4096]{0}', space=vmem, size = 0x1000, scoped, tag = 'output window, operand 0, single buffered']
    #allocation3 [shape = 's32[1]{0}', space=sflag, size = 0x4, scoped, tag = 'scoped memory for tpu_custom_call.1']
    %9 = vsyncpa [#allocation3], 0
    // Predicated region
    $region2: #{tpu_custom_call.1} parent=1 // pred_check
      _
    $region3: #{tpu_custom_call.1} parent=1 // pred_check_branch
      %11 = sbr.rel (0) target = $region5
    $region4: #{tpu_custom_call.1} parent=1 // pred_region
      _
    $region5: #{tpu_custom_call.1} parent=1 // pred_fallthru
      _
    // Predicated region
    $region6: #{tpu_custom_call.1} parent=1 // pred_check
      _
    $region7: #{tpu_custom_call.1} parent=1 // pred_check_branch
      %13 = sbr.rel (0) target = $region9
    $region8: #{tpu_custom_call.1} parent=1 // pred_region
      _
    $region9: #{tpu_custom_call.1} parent=1 // pred_fallthru
      _
    // Predicated region
    $region10: #{tpu_custom_call.1} parent=1 // pred_check
      _
    $region11: #{tpu_custom_call.1} parent=1 // pred_check_branch
      %15 = sbr.rel (0) target = $region13
    $region12: #{tpu_custom_call.1} parent=1 // pred_region
      _
    $region13: #{tpu_custom_call.1} parent=1 // pred_fallthru
      _
    // Predicated region
    $region14: #{tpu_custom_call.1} parent=1 // pred_check
      _
    $region15: #{tpu_custom_call.1} parent=1 // pred_check_branch
      %17 = sbr.rel (0) target = $region17
    $region16: #{tpu_custom_call.1} parent=1 // pred_region
      _
    $region17: #{tpu_custom_call.1} parent=1 // pred_fallthru
      _
    %v18 = vld [vmem:[%s0] sm:$0xff]
    %v19 = vld [vmem:[%s1] sm:$0xff]
    %v20 = vld [vmem:[%s1 + $0x8] sm:$0xff]
    %v21 = vld [vmem:[%s1 + $0x10] sm:$0xff]
    %v22 = vld [vmem:[%s1 + $0x18] sm:$0xff]
    %v23 = vld [vmem:[%s1 + $0x20] sm:$0xff]
    %v24 = vld [vmem:[%s1 + $0x28] sm:$0xff]
    %v25 = vld [vmem:[%s1 + $0x30] sm:$0xff]
    %v26 = vld [vmem:[%s1 + $0x38] sm:$0xff]
    %vm27 = vcmask 523264
    %v29 = vsel %vm27, %v18, 0
    %31 = vmatprep.subr.mxu0 0.0
    %32 = vmatpush1.msra.mxu0 0.0
    %33 = vmatprep.subr.mxu0 0.0
    %34 = vmatpush1.msra.mxu0 0.0
    %35 = vmatprep.subr.mxu0 0.0
    %36 = vmatpush1.msra.mxu0 0.0
    %37 = vmatprep.subr.mxu0 0.0
    %38 = vmatpush1.msra.mxu0 0.0
    %39 = vmatprep.subr.mxu0 0.0
    %40 = vmatpush1.msra.mxu0 0.0
    %41 = vmatprep.subr.mxu0 0.0
    %42 = vmatpush1.msra.mxu0 0.0
    %43 = vmatprep.subr.mxu0 0.0
    %44 = vmatpush1.msra.mxu0 0.0
    %45 = vmatprep.subr.mxu0 0.0
    %46 = vmatpush1.msra.mxu0 0.0
    %47 = vmatprep.subr.mxu0 0.0
    %48 = vmatpush1.msra.mxu0 %v26
    %49 = vmatprep.subr.mxu0 0.0
    %50 = vmatpush1.msra.mxu0 %v25
    %51 = vmatprep.subr.mxu0 0.0
    %52 = vmatpush1.msra.mxu0 %v24
    %53 = vmatprep.subr.mxu0 0.0
    %54 = vmatpush1.msra.mxu0 %v23
    %55 = vmatprep.subr.mxu0 0.0
    %56 = vmatpush1.msra.mxu0 %v22
    %57 = vmatprep.subr.mxu0 0.0
    %58 = vmatpush1.msra.mxu0 %v21
    %59 = vmatprep.subr.mxu0 0.0
    %60 = vmatpush1.msra.mxu0 %v20
    %61 = vmatprep.subr.mxu0 0.0
    %62 = vmatpush1.msra.mxu0 %v19
    %63 = vmatprep.subr.mxu0 0.0
    %64 = vmatpush2.msra.mxu0 0.0
    %65 = vmatprep.subr.mxu0 0.0
    %66 = vmatpush2.msra.mxu0 0.0
    %67 = vmatprep.subr.mxu0 0.0
    %68 = vmatpush2.msra.mxu0 0.0
    %69 = vmatprep.subr.mxu0 0.0
    %70 = vmatpush2.msra.mxu0 0.0
    %71 = vmatprep.subr.mxu0 0.0
    %72 = vmatpush2.msra.mxu0 0.0
    %73 = vmatprep.subr.mxu0 0.0
    %74 = vmatpush2.msra.mxu0 0.0
    %75 = vmatprep.subr.mxu0 0.0
    %76 = vmatpush2.msra.mxu0 0.0
    %77 = vmatprep.subr.mxu0 0.0
    %78 = vmatpush2.msra.mxu0 0.0
    %79 = vmatprep.subr.mxu0 0.0
    %80 = vmatpush2.msra.mxu0 0.0
    %81 = vmatprep.subr.mxu0 0.0
    %82 = vmatpush2.msra.mxu0 0.0
    %83 = vmatprep.subr.mxu0 0.0
    %84 = vmatpush2.msra.mxu0 0.0
    %85 = vmatprep.subr.mxu0 0.0
    %86 = vmatpush2.msra.mxu0 0.0
    %87 = vmatprep.subr.mxu0 0.0
    %88 = vmatpush2.msra.mxu0 0.0
    %89 = vmatprep.subr.mxu0 0.0
    %90 = vmatpush2.msra.mxu0 0.0
    %91 = vmatprep.subr.mxu0 0.0
    %92 = vmatpush2.msra.mxu0 0.0
    %93 = vmatprep.subr.mxu0 0.0
    %94 = vmatpush2.msra.mxu0 0.0
    %95 = vmatprep.mubr.f32.mxu0 0.0
    %96 = vmatmul.mubr.f32.gmra.mxu0 %v29
    %v97 = vpop.f32.mrf.mxu0
    %v98 = vadd.f32 0.0, %v97
    %v99 = vpop.f32.mrf.mxu0
    %100 = vdwg.mxu0
    %vm101 = vcmask 261120
    %v102 = vsel %vm101, %v98, 0.0
    %v103 = vrot.slane %v102, 4
    %v104 = vadd.f32 %v102, %v103
    %v105 = vrot.slane %v104, 2
    %v106 = vadd.f32 %v104, %v105
    %v107 = vrot.slane %v106, 1
    %v108 = vadd.f32 %v106, %v107
    %v109 = vmul.f32 %v108, 0.125
    %v110 = vmul.f32 %v98, %v98
    %v111 = vsel %vm101, %v110, 0.0
    %v112 = vrot.slane %v111, 4
    %v113 = vadd.f32 %v111, %v112
    %v114 = vrot.slane %v113, 2
    %v115 = vadd.f32 %v113, %v114
    %v116 = vrot.slane %v115, 1
    %v117 = vadd.f32 %v115, %v116
    %v118 = vmul.f32 %v117, 0.125
    %v119 = vmul.f32 %v109, %v109
    %v120 = vsub.f32 %v118, %v119
    %v121 = vmax.f32 %v120, 0.0
    %v122 = vld [vmem:[%s2] sm:$0x1]
    %v123 = vadd.f32 %v121, 1e-05
    %v124 = vrsqrt.pop %v123
    %v125 = vmul.f32 %v122, %v124
    %v126 = vld [vmem:[%s3] sm:$0x1]
    %v127 = vmul.f32 %v109, %v125
    %v128 = vsub.f32 %v126, %v127
    %v130 = vlaneseq
    %v131 = vshrl.u32 %v130, 7
    %v132 = vsub.s32 0, %v131
    %v133 = vrot.slane %v125, %v132
    %v135 = vmul.f32 %v98, %v133
    %v137 = vlaneseq
    %v138 = vshrl.u32 %v137, 7
    %v139 = vsub.s32 0, %v138
    %v140 = vrot.slane %v128, %v139
    %v142 = vadd.f32 %v135, %v140
    %v143 = vmax.f32 %v142, 0.0
    %144 = vst.msk [vmem:[#allocation2] sm:$0xff] %vm101, %v143
    %p145 = scmp.eq.s32.totalorder 0, 0
    // Predicated region
    $region18: #{tpu_custom_call.1} parent=1 // pred_check
      %p146 = pneg %p145
    $region19: #{tpu_custom_call.1} parent=1 // pred_check_branch
      %148 = sbr.rel (%p146) target = $region21
    $region20: #{tpu_custom_call.1} parent=1 // pred_region
      %149 = vrot.lane.b32.xlu0 %v18, 32
      %v150 = vpop.permute.xlu0 %149
      %vm152 = vcmask 785664
      %153 = vst.msk [vmem:[#allocation2] sm:$0xff] %vm152, %v150
    $region21: #{tpu_custom_call.1} parent=1 // pred_fallthru
      _
    // Predicated region
    $region22: #{tpu_custom_call.1} parent=1 // pred_check
      _
    $region23: #{tpu_custom_call.1} parent=1 // pred_check_branch
      %155 = sbr.rel (0) target = $region25
    $region24: #{tpu_custom_call.1} parent=1 // pred_region
      %s157 = ssub.s32 128, 128
      %158 = vsyncadd [#allocation3], %s157
      %s160 = sshll.u32 [#allocation2], 4
      %s161 = int_to_ptr.vmem [resolvable:$true] %s160
      %163 = dma.vmem_to_hbm [thread:$0]  %s161, 128, %s4, [#allocation3]
    $region25: #{tpu_custom_call.1} parent=1 // pred_fallthru
      _
    // Predicated region
    $region26: #{tpu_custom_call.1} parent=1 // pred_check
      _
    $region27: #{tpu_custom_call.1} parent=1 // pred_check_branch
      %165 = sbr.rel (0) target = $region29
    $region28: #{tpu_custom_call.1} parent=1 // pred_region
      %166 = dma.done [#allocation3], 128
    $region29: #{tpu_custom_call.1} parent=1 // pred_fallthru
      _
    %167 = vsyncpa [#allocation3], 1

</llo_original>
